<compile_context>
chip_gen: v5e
topology: v5e:2x2
jax: 0.10.0
libtpu: 0.0.40
codegen_flags: <defaults>
</compile_context>

<pallas_src>
import functools
import math

import jax
import jax.numpy as jnp
from jax.experimental import pallas as pl
from jax.experimental.pallas import tpu as pltpu

_EPS = 1e-5
_LANE = 128


def _round_up(x, m):
    return (x + m - 1) // m * m


def _pad2(a, rows, cols):
    r, c = a.shape
    return jnp.pad(a, ((0, rows - r), (0, cols - c)))


# --------------------------------------------------------------------------
# Kernel 1: batch-norm statistics + affine fold (single pass over the batch).
# Outputs an (8, D_P) table of rows:
#   [s1a, t1a, s1b, t1b, s2a, t2a, s2b, t2b]
# so that BN+affine for composer k on half h is simply  x_h * s + t.
# --------------------------------------------------------------------------
def _bn_fold_kernel(x0_ref, x1_ref, gb_ref, ss_ref, *, n_valid):
    x0 = x0_ref[...]
    x1 = x1_ref[...]
    b_pad = x0_ref.shape[0]
    inv_b = 1.0 / float(n_valid)

    if b_pad != n_valid:  # static: mask zero-padded batch rows out of the stats
        rid = jax.lax.broadcasted_iota(jnp.int32, x0.shape, 0)
        msk = (rid < n_valid).astype(jnp.float32)
    else:
        msk = None

    def stats(xh):
        xs = xh if msk is None else xh * msk
        mean = jnp.sum(xs, axis=0, keepdims=True) * inv_b
        cent = xh - mean
        sq = cent * cent
        if msk is not None:
            sq = sq * msk
        var = jnp.sum(sq, axis=0, keepdims=True) * inv_b
        return mean, jax.lax.rsqrt(var + _EPS)

    mean0, istd0 = stats(x0)
    mean1, istd1 = stats(x1)

    gb = gb_ref[...]  # rows: [g1a, b1a, g1b, b1b, g2a, b2a, g2b, b2b]

    def fold(g, b, mean, istd):
        s = g * istd
        return s, b - mean * s

    s1a, t1a = fold(gb[0:1], gb[1:2], mean0, istd0)
    s1b, t1b = fold(gb[2:3], gb[3:4], mean1, istd1)
    s2a, t2a = fold(gb[4:5], gb[5:6], mean0, istd0)
    s2b, t2b = fold(gb[6:7], gb[7:8], mean1, istd1)

    ss_ref[...] = jnp.concatenate(
        [s1a, t1a, s1b, t1b, s2a, t2a, s2b, t2b], axis=0)


# --------------------------------------------------------------------------
# Kernel 2: batch-tiled fused BN-apply + 3 matmuls + gated composition.
# --------------------------------------------------------------------------
def _tirg_main_kernel(w_ref, ss_ref, x0_ref, x1_ref,
                      w1a_ref, w1b_ref, c1_ref,
                      w2at_ref, w2ab_ref, c2a_ref,
                      w2b_ref, c2b_ref,
                      out_ref):
    x0 = x0_ref[...]
    x1 = x1_ref[...]
    mm_dtype = w1a_ref.dtype  # bf16 operands, f32 accumulation

    def bn_relu(xh, s, t):
        return jnp.maximum(xh * s + t, 0.0).astype(mm_dtype)

    # gated_feature_composer: BN -> ReLU -> Linear (K split over the two halves)
    h1a = bn_relu(x0, ss_ref[0:1, :], ss_ref[1:2, :])
    h1b = bn_relu(x1, ss_ref[2:3, :], ss_ref[3:4, :])
    f1 = (jnp.dot(h1a, w1a_ref[...], preferred_element_type=jnp.float32)
          + jnp.dot(h1b, w1b_ref[...], preferred_element_type=jnp.float32)
          + c1_ref[...])

    # res_info_composer: BN -> ReLU -> Linear -> ReLU -> Linear
    h2a = bn_relu(x0, ss_ref[4:5, :], ss_ref[5:6, :])
    h2b = bn_relu(x1, ss_ref[6:7, :], ss_ref[7:8, :])
    t = (jnp.dot(h2a, w2at_ref[...], preferred_element_type=jnp.float32)
         + jnp.dot(h2b, w2ab_ref[...], preferred_element_type=jnp.float32)
         + c2a_ref[...])
    t = jnp.maximum(t, 0.0).astype(mm_dtype)
    f2 = jnp.dot(t, w2b_ref[...], preferred_element_type=jnp.float32) + c2b_ref[...]

    # sigmoid(f1) = 1 / (1 + exp(-f1)); exp + approx reciprocal stay on the EUP slot.
    gate = pl.reciprocal(1.0 + jnp.exp(-f1), approx=True)
    out_ref[...] = gate * x0 * w_ref[0] + f2 * w_ref[1]


# --------------------------------------------------------------------------
# Wrapper
# --------------------------------------------------------------------------
def tirg_forward(x, params, *, matmul_dtype=jnp.bfloat16):
    """x = (x0, x1), each (B, D) float32. Returns (B, out_c) float32."""
    x0, x1 = x
    B, D = x0.shape
    in_c = 2 * D
    out_c = params["W1"].shape[1]
    # sigmoid(f1) * x[0] in the PyTorch module requires out_c == D.
    assert out_c == D, "TIRG requires out_c == embed dim"

    f32 = jnp.float32
    D_P = _round_up(D, _LANE)
    OC_P = _round_up(out_c, _LANE)
    IC_P = _round_up(in_c, _LANE)
    TB = _round_up(B, 8) if B <= 128 else 128
    B_P = _round_up(B, TB)
    nb = B_P // TB

    x0_p = _pad2(x0.astype(f32), B_P, D_P)
    x1_p = _pad2(x1.astype(f32), B_P, D_P)

    # Pack BN affine params (split per half) into one (8, D_P) table.
    def half(v):
        return v[:, :D], v[:, D:]

    g1a, g1b = half(params["g1"]); b1a, b1b = half(params["b1"])
    g2a, g2b = half(params["g2"]); b2a, b2b = half(params["b2"])
    gb = _pad2(jnp.concatenate([g1a, b1a, g1b, b1b, g2a, b2a, g2b, b2b],
                               axis=0).astype(f32), 8, D_P)

    vmem = pl.BlockSpec(memory_space=pltpu.MemorySpace.VMEM)
    smem = pl.BlockSpec(memory_space=pltpu.MemorySpace.SMEM)

    # Pass 1: BN batch stats + affine fold.
    ss = pl.pallas_call(
        functools.partial(_bn_fold_kernel, n_valid=B),
        out_shape=jax.ShapeDtypeStruct((8, D_P), f32),
        in_specs=[vmem, vmem, vmem],
        out_specs=vmem,
    )(x0_p, x1_p, gb)

    # Split Linear weights along K (the concat axis), pad to lane-dense tiles,
    # cast matmul operands to bf16 (biases stay f32).
    W1, W2a, W2b = params["W1"], params["W2a"], params["W2b"]
    w1a = _pad2(W1[:D], D_P, OC_P).astype(matmul_dtype)
    w1b = _pad2(W1[D:], D_P, OC_P).astype(matmul_dtype)
    c1 = _pad2(params["c1"].astype(f32), 1, OC_P)
    w2at = _pad2(W2a[:D], D_P, IC_P).astype(matmul_dtype)
    w2ab = _pad2(W2a[D:], D_P, IC_P).astype(matmul_dtype)
    c2a = _pad2(params["c2a"].astype(f32), 1, IC_P)
    w2bp = _pad2(W2b, IC_P, OC_P).astype(matmul_dtype)
    c2b = _pad2(params["c2b"].astype(f32), 1, OC_P)

    resident = lambda shape: pl.BlockSpec(shape, lambda i: (0, 0))

    # Pass 2: batch-parallel fused composition.
    out_p = pl.pallas_call(
        _tirg_main_kernel,
        out_shape=jax.ShapeDtypeStruct((B_P, OC_P), f32),
        grid=(nb,),
        in_specs=[
            smem,                                            # w  (4,) scalars
            resident((8, D_P)),                              # folded BN scale/shift
            pl.BlockSpec((TB, D_P), lambda i: (i, 0)),       # x0 tile
            pl.BlockSpec((TB, D_P), lambda i: (i, 0)),       # x1 tile
            resident((D_P, OC_P)),                           # W1[:D]
            resident((D_P, OC_P)),                           # W1[D:]
            resident((1, OC_P)),                             # c1
            resident((D_P, IC_P)),                           # W2a[:D]
            resident((D_P, IC_P)),                           # W2a[D:]
            resident((1, IC_P)),                             # c2a
            resident((IC_P, OC_P)),                          # W2b
            resident((1, OC_P)),                             # c2b
        ],
        out_specs=pl.BlockSpec((TB, OC_P), lambda i: (i, 0)),
        compiler_params=pltpu.CompilerParams(
            dimension_semantics=("parallel",)),
    )(params["w"].astype(f32), ss, x0_p, x1_p,
      w1a, w1b, c1, w2at, w2ab, c2a, w2bp, c2b)

    return out_p[:B, :out_c]


# --------------------------------------------------------------------------
# Params + pure-JAX reference
# --------------------------------------------------------------------------
def init_params(key, in_c, out_c):
    """Deterministic synthetic init (PyTorch-like Linear init, default BN init)."""
    ks = jax.random.split(key, 3)

    def lin(k, fan_in, fan_out):
        bound = 1.0 / math.sqrt(fan_in)
        kw, kb = jax.random.split(k)
        W = jax.random.uniform(kw, (fan_in, fan_out), jnp.float32, -bound, bound)
        b = jax.random.uniform(kb, (1, fan_out), jnp.float32, -bound, bound)
        return W, b

    W1, c1 = lin(ks[0], in_c, out_c)
    W2a, c2a = lin(ks[1], in_c, in_c)
    W2b, c2b = lin(ks[2], in_c, out_c)
    return dict(
        w=jnp.array([1.0, 10.0, 1.0, 1.0], jnp.float32),
        g1=jnp.ones((1, in_c), jnp.float32), b1=jnp.zeros((1, in_c), jnp.float32),
        W1=W1, c1=c1,
        g2=jnp.ones((1, in_c), jnp.float32), b2=jnp.zeros((1, in_c), jnp.float32),
        W2a=W2a, c2a=c2a, W2b=W2b, c2b=c2b,
    )


def tirg_reference(x, p, matmul_dtype=jnp.float32):
    """Pure-JAX reference mirroring the PyTorch forward (training-mode BN).

    matmul_dtype=jnp.bfloat16 gives the precision-matched reference for the
    kernel (bf16 matmul operands, f32 accumulation).
    """
    x0, x1 = x
    xc = jnp.concatenate([x0, x1], axis=1)
    mean = jnp.mean(xc, axis=0, keepdims=True)
    var = jnp.mean((xc - mean) ** 2, axis=0, keepdims=True)
    xn = (xc - mean) * jax.lax.rsqrt(var + _EPS)

    def mm(a, w):
        return jnp.dot(a.astype(matmul_dtype), w.astype(matmul_dtype),
                       preferred_element_type=jnp.float32)

    h1 = jnp.maximum(xn * p["g1"] + p["b1"], 0.0)
    f1 = mm(h1, p["W1"]) + p["c1"]

    h2 = jnp.maximum(xn * p["g2"] + p["b2"], 0.0)
    t = jnp.maximum(mm(h2, p["W2a"]) + p["c2a"], 0.0)
    f2 = mm(t, p["W2b"]) + p["c2b"]

    return jax.nn.sigmoid(f1) * x0 * p["w"][0] + f2 * p["w"][1]


if __name__ == "__main__":
    B, D = 8, 32          # embed dim D -> in_c = 2*D (ConcatModule), out_c = D
    in_c, out_c = 2 * D, D

    key = jax.random.PRNGKey(0)
    kx0, kx1, kp = jax.random.split(key, 3)
    x0 = jax.random.normal(kx0, (B, D), jnp.float32)
    x1 = jax.random.normal(kx1, (B, D), jnp.float32)
    params = init_params(kp, in_c, out_c)

    out = jax.block_until_ready(tirg_forward((x0, x1), params))
    assert out.shape == (B, out_c)

    # Precision-matched reference: same bf16 matmul operands / f32 accumulation.
    ref = jax.block_until_ready(
        tirg_reference((x0, x1), params, matmul_dtype=jnp.bfloat16))
    assert jnp.allclose(out, ref, atol=1e-2, rtol=1e-2), "mismatch vs reference"

    print("KERNEL_OK")
</pallas_src>

<mosaic_0001>
module attributes {stable_mosaic.version = 11 : i64} {
  func.func @_bn_fold_kernel(%arg0: memref<8x128xf32, #tpu.memory_space<vmem>>, %arg1: memref<8x128xf32, #tpu.memory_space<vmem>>, %arg2: memref<8x128xf32, #tpu.memory_space<vmem>>, %arg3: memref<8x128xf32, #tpu.memory_space<vmem>>) attributes {dimension_semantics = [], scalar_prefetch = 0 : i64, scratch_operands = 0 : i64, tpu.core_type = #tpu.core_type<tc>} {
    %c0 = arith.constant 0 : index
    %c0_0 = arith.constant 0 : index
    %0 = vector.load %arg0[%c0, %c0_0] : memref<8x128xf32, #tpu.memory_space<vmem>>, vector<8x128xf32>
    %c0_1 = arith.constant 0 : index
    %c0_2 = arith.constant 0 : index
    %1 = vector.load %arg1[%c0_1, %c0_2] : memref<8x128xf32, #tpu.memory_space<vmem>>, vector<8x128xf32>
    %cst = arith.constant dense<0.000000e+00> : vector<128xf32>
    %2 = vector.multi_reduction <add>, %0, %cst [0] : vector<8x128xf32> to vector<128xf32>
    %3 = vector.shape_cast %2 : vector<128xf32> to vector<1x128xf32>
    %cst_3 = arith.constant 1.250000e-01 : f32
    %4 = vector.broadcast %cst_3 : f32 to vector<1x128xf32>
    %5 = arith.mulf %3, %4 : vector<1x128xf32>
    %6 = vector.broadcast %5 : vector<1x128xf32> to vector<8x128xf32>
    %7 = arith.subf %0, %6 : vector<8x128xf32>
    %8 = arith.mulf %7, %7 : vector<8x128xf32>
    %cst_4 = arith.constant dense<0.000000e+00> : vector<128xf32>
    %9 = vector.multi_reduction <add>, %8, %cst_4 [0] : vector<8x128xf32> to vector<128xf32>
    %10 = vector.shape_cast %9 : vector<128xf32> to vector<1x128xf32>
    %cst_5 = arith.constant 1.250000e-01 : f32
    %11 = vector.broadcast %cst_5 : f32 to vector<1x128xf32>
    %12 = arith.mulf %10, %11 : vector<1x128xf32>
    %cst_6 = arith.constant 9.99999974E-6 : f32
    %13 = vector.broadcast %cst_6 : f32 to vector<1x128xf32>
    %14 = arith.addf %12, %13 : vector<1x128xf32>
    %15 = math.rsqrt %14 : vector<1x128xf32>
    %cst_7 = arith.constant dense<0.000000e+00> : vector<128xf32>
    %16 = vector.multi_reduction <add>, %1, %cst_7 [0] : vector<8x128xf32> to vector<128xf32>
    %17 = vector.shape_cast %16 : vector<128xf32> to vector<1x128xf32>
    %cst_8 = arith.constant 1.250000e-01 : f32
    %18 = vector.broadcast %cst_8 : f32 to vector<1x128xf32>
    %19 = arith.mulf %17, %18 : vector<1x128xf32>
    %20 = vector.broadcast %19 : vector<1x128xf32> to vector<8x128xf32>
    %21 = arith.subf %1, %20 : vector<8x128xf32>
    %22 = arith.mulf %21, %21 : vector<8x128xf32>
    %cst_9 = arith.constant dense<0.000000e+00> : vector<128xf32>
    %23 = vector.multi_reduction <add>, %22, %cst_9 [0] : vector<8x128xf32> to vector<128xf32>
    %24 = vector.shape_cast %23 : vector<128xf32> to vector<1x128xf32>
    %cst_10 = arith.constant 1.250000e-01 : f32
    %25 = vector.broadcast %cst_10 : f32 to vector<1x128xf32>
    %26 = arith.mulf %24, %25 : vector<1x128xf32>
    %cst_11 = arith.constant 9.99999974E-6 : f32
    %27 = vector.broadcast %cst_11 : f32 to vector<1x128xf32>
    %28 = arith.addf %26, %27 : vector<1x128xf32>
    %29 = math.rsqrt %28 : vector<1x128xf32>
    %c0_12 = arith.constant 0 : index
    %c0_13 = arith.constant 0 : index
    %30 = vector.load %arg2[%c0_12, %c0_13] : memref<8x128xf32, #tpu.memory_space<vmem>>, vector<8x128xf32>
    %31 = vector.extract_strided_slice %30 {offsets = [0, 0], sizes = [1, 128], strides = [1, 1]} : vector<8x128xf32> to vector<1x128xf32>
    %32 = vector.extract_strided_slice %30 {offsets = [1, 0], sizes = [1, 128], strides = [1, 1]} : vector<8x128xf32> to vector<1x128xf32>
    %33 = arith.mulf %31, %15 : vector<1x128xf32>
    %34 = arith.mulf %5, %33 : vector<1x128xf32>
    %35 = arith.subf %32, %34 : vector<1x128xf32>
    %36 = vector.extract_strided_slice %30 {offsets = [2, 0], sizes = [1, 128], strides = [1, 1]} : vector<8x128xf32> to vector<1x128xf32>
    %37 = vector.extract_strided_slice %30 {offsets = [3, 0], sizes = [1, 128], strides = [1, 1]} : vector<8x128xf32> to vector<1x128xf32>
    %38 = arith.mulf %36, %29 : vector<1x128xf32>
    %39 = arith.mulf %19, %38 : vector<1x128xf32>
    %40 = arith.subf %37, %39 : vector<1x128xf32>
    %41 = vector.extract_strided_slice %30 {offsets = [4, 0], sizes = [1, 128], strides = [1, 1]} : vector<8x128xf32> to vector<1x128xf32>
    %42 = vector.extract_strided_slice %30 {offsets = [5, 0], sizes = [1, 128], strides = [1, 1]} : vector<8x128xf32> to vector<1x128xf32>
    %43 = arith.mulf %41, %15 : vector<1x128xf32>
    %44 = arith.mulf %5, %43 : vector<1x128xf32>
    %45 = arith.subf %42, %44 : vector<1x128xf32>
    %46 = vector.extract_strided_slice %30 {offsets = [6, 0], sizes = [1, 128], strides = [1, 1]} : vector<8x128xf32> to vector<1x128xf32>
    %47 = vector.extract_strided_slice %30 {offsets = [7, 0], sizes = [1, 128], strides = [1, 1]} : vector<8x128xf32> to vector<1x128xf32>
    %48 = arith.mulf %46, %29 : vector<1x128xf32>
    %49 = arith.mulf %19, %48 : vector<1x128xf32>
    %50 = arith.subf %47, %49 : vector<1x128xf32>
    %51 = tpu.concatenate %33, %35, %38, %40, %43, %45, %48, %50 in 0 : vector<1x128xf32>, vector<1x128xf32>, vector<1x128xf32>, vector<1x128xf32>, vector<1x128xf32>, vector<1x128xf32>, vector<1x128xf32>, vector<1x128xf32> -> vector<8x128xf32>
    %c0_14 = arith.constant 0 : index
    %c0_15 = arith.constant 0 : index
    %52 = vector.load %arg3[%c0_14, %c0_15] : memref<8x128xf32, #tpu.memory_space<vmem>>, vector<8x128xf32>
    tpu.vector_store %arg3[%c0_14, %c0_15], %51 {strides = array<i32>} : memref<8x128xf32, #tpu.memory_space<vmem>>, vector<8x128xf32>,
    return
  }
}

</mosaic_0001>

<llo_original>
// kernel: tpu_custom_call.1
$region0: #{tpu_custom_call.1}
  #allocation0 [shape = 'u32[]', space=smem, size = 0x4, offset = 0x4, fixed_abs, tag = 'smem constant byte address 0x4 - core index']
  #allocation1 [shape = 'u32[72,128]{1,0:T(1,128)}', space=vmem, size = 0x9000, scoped, tag = 'internal scratch']
  %s0 = inlined_call_operand.hbm [shape: f32[8,128], index: 0, kind: input, shape index: {}]
  %s1 = inlined_call_operand.hbm [shape: f32[8,128], index: 1, kind: input, shape index: {}]
  %s2 = inlined_call_operand.hbm [shape: f32[8,128], index: 2, kind: input, shape index: {}]
  %s3 = inlined_call_operand.hbm [shape: f32[8,128], index: 3, kind: output, shape index: {}]
  %s4 = sld [smem:[#allocation0]]
  $region34: #{tpu_custom_call.1} parent=0
    _
  %s6 = ssub.s32 1, %s4
  %s7 = scalar_select 0, %s6, %s4
  $region1: #{tpu_custom_call.1} parent=0
    #allocation2 [shape = 'u8[4096]{0}', space=vmem, size = 0x1000, scoped, tag = 'input window, operand 0, single buffered']
    #allocation3 [shape = 's32[1]{0}', space=sflag, size = 0x4, scoped, tag = 'scoped memory for tpu_custom_call.1']
    #allocation4 [shape = 's32[1]{0}', space=sflag, size = 0x4, scoped, tag = 'scoped memory for tpu_custom_call.1']
    #allocation5 [shape = 'u8[4096]{0}', space=vmem, size = 0x1000, scoped, tag = 'input window, operand 1, single buffered']
    #allocation6 [shape = 's32[1]{0}', space=sflag, size = 0x4, scoped, tag = 'scoped memory for tpu_custom_call.1']
    #allocation7 [shape = 'u8[4096]{0}', space=vmem, size = 0x1000, scoped, tag = 'input window, operand 2, single buffered']
    #allocation8 [shape = 'u8[4096]{0}', space=vmem, size = 0x1000, scoped, tag = 'output window, operand 0, single buffered']
    %8 = vsyncpa [#allocation3], 0
    %9 = vsyncpa [#allocation6], 0
    %10 = vsyncpa [#allocation4], 0
    // Predicated region
    $region2: #{tpu_custom_call.1} parent=1 // pred_check
      _
    $region3: #{tpu_custom_call.1} parent=1 // pred_check_branch
      %12 = sbr.rel (0) target = $region5
    $region4: #{tpu_custom_call.1} parent=1 // pred_region
      %14 = vsyncadd [#allocation3], 0
      %s16 = sshll.u32 %s0, 4
      %s17 = int_to_ptr.hbm [resolvable:$true] %s16
      %s18 = sshll.u32 [#allocation2], 4
      %s19 = int_to_ptr.vmem [resolvable:$true] %s18
      %21 = dma.hbm_to_vmem [thread:$0]  %s17, 128, %s19, [#allocation3]
    $region5: #{tpu_custom_call.1} parent=1 // pred_fallthru
      _
    // Predicated region
    $region6: #{tpu_custom_call.1} parent=1 // pred_check
      _
    $region7: #{tpu_custom_call.1} parent=1 // pred_check_branch
      %23 = sbr.rel (0) target = $region9
    $region8: #{tpu_custom_call.1} parent=1 // pred_region
      %25 = vsyncadd [#allocation6], 0
      %s27 = sshll.u32 %s1, 4
      %s28 = int_to_ptr.hbm [resolvable:$true] %s27
      %s29 = sshll.u32 [#allocation5], 4
      %s30 = int_to_ptr.vmem [resolvable:$true] %s29
      %32 = dma.hbm_to_vmem [thread:$0]  %s28, 128, %s30, [#allocation6]
    $region9: #{tpu_custom_call.1} parent=1 // pred_fallthru
      _
    // Predicated region
    $region10: #{tpu_custom_call.1} parent=1 // pred_check
      _
    $region11: #{tpu_custom_call.1} parent=1 // pred_check_branch
      %34 = sbr.rel (0) target = $region13
    $region12: #{tpu_custom_call.1} parent=1 // pred_region
      %36 = vsyncadd [#allocation6], 0
      %s38 = sshll.u32 %s2, 4
      %s39 = int_to_ptr.hbm [resolvable:$true] %s38
      %s40 = sshll.u32 [#allocation7], 4
      %s41 = int_to_ptr.vmem [resolvable:$true] %s40
      %43 = dma.hbm_to_vmem [thread:$0]  %s39, 128, %s41, [#allocation6]
    $region13: #{tpu_custom_call.1} parent=1 // pred_fallthru
      _
    // Predicated region
    $region14: #{tpu_custom_call.1} parent=1 // pred_check
      _
    $region15: #{tpu_custom_call.1} parent=1 // pred_check_branch
      %45 = sbr.rel (0) target = $region17
    $region16: #{tpu_custom_call.1} parent=1 // pred_region
      %47 = dma.done [#allocation3], 128
    $region17: #{tpu_custom_call.1} parent=1 // pred_fallthru
      _
    // Predicated region
    $region18: #{tpu_custom_call.1} parent=1 // pred_check
      _
    $region19: #{tpu_custom_call.1} parent=1 // pred_check_branch
      %49 = sbr.rel (0) target = $region21
    $region20: #{tpu_custom_call.1} parent=1 // pred_region
      %51 = dma.done [#allocation6], 128
    $region21: #{tpu_custom_call.1} parent=1 // pred_fallthru
      _
    // Predicated region
    $region22: #{tpu_custom_call.1} parent=1 // pred_check
      _
    $region23: #{tpu_custom_call.1} parent=1 // pred_check_branch
      %53 = sbr.rel (0) target = $region25
    $region24: #{tpu_custom_call.1} parent=1 // pred_region
      %55 = dma.done [#allocation6], 128
    $region25: #{tpu_custom_call.1} parent=1 // pred_fallthru
      _
    %v56 = vld [vmem:[#allocation2] sm:$0xff]
    %v57 = vld [vmem:[#allocation5] sm:$0xff]
    %v58 = vrot.slane %v56, 4
    %v59 = vadd.f32 %v56, %v58
    %v60 = vrot.slane %v59, 2
    %v61 = vadd.f32 %v59, %v60
    %v62 = vrot.slane %v61, 1
    %v63 = vadd.f32 %v61, %v62
    %v64 = vmul.f32 %v63, 0.125
    %v65 = vsub.f32 %v56, %v64
    %v66 = vmul.f32 %v65, %v65
    %v67 = vrot.slane %v66, 4
    %v68 = vadd.f32 %v66, %v67
    %v69 = vrot.slane %v68, 2
    %v70 = vadd.f32 %v68, %v69
    %v71 = vrot.slane %v70, 1
    %v72 = vadd.f32 %v70, %v71
    %v73 = vmul.f32 %v72, 0.125
    %v74 = vadd.f32 %v73, 1e-05
    %v75 = vrsqrt.pop %v74
    %v76 = vmul.f32 %v75, %v74
    %v77 = vmul.f32 %v76, %v75
    %v78 = vmul.f32 0.5, %v77
    %v79 = vsub.f32 1.5, %v78
    %v80 = vmul.f32 %v75, %v79
    %vm81 = vweird.f32 %v74
    %vm82 = vweird.f32 %v75
    %vm83 = vmor %vm81, %vm82
    %v84 = vsel %vm83, %v75, %v80
    %v85 = vrot.slane %v57, 4
    %v86 = vadd.f32 %v57, %v85
    %v87 = vrot.slane %v86, 2
    %v88 = vadd.f32 %v86, %v87
    %v89 = vrot.slane %v88, 1
    %v90 = vadd.f32 %v88, %v89
    %v91 = vmul.f32 %v90, 0.125
    %v92 = vsub.f32 %v57, %v91
    %v93 = vmul.f32 %v92, %v92
    %v94 = vrot.slane %v93, 4
    %v95 = vadd.f32 %v93, %v94
    %v96 = vrot.slane %v95, 2
    %v97 = vadd.f32 %v95, %v96
    %v98 = vrot.slane %v97, 1
    %v99 = vadd.f32 %v97, %v98
    %v100 = vmul.f32 %v99, 0.125
    %v101 = vadd.f32 %v100, 1e-05
    %v102 = vrsqrt.pop %v101
    %v103 = vmul.f32 %v102, %v101
    %v104 = vmul.f32 %v103, %v102
    %v105 = vmul.f32 0.5, %v104
    %v106 = vsub.f32 1.5, %v105
    %v107 = vmul.f32 %v102, %v106
    %vm108 = vweird.f32 %v101
    %vm109 = vweird.f32 %v102
    %vm110 = vmor %vm108, %vm109
    %v111 = vsel %vm110, %v102, %v107
    %v112 = vld [vmem:[#allocation7] sm:$0xff]
    %v113 = vmul.f32 %v112, %v84
    %v114 = vmul.f32 %v64, %v113
    %v116 = vrot.slane %v114, 7
    %v118 = vsub.f32 %v112, %v116
    %v119 = vmul.f32 %v112, %v111
    %v120 = vmul.f32 %v91, %v119
    %v122 = vrot.slane %v120, 7
    %v124 = vsub.f32 %v112, %v122
    %vm125 = vcmask 1040384
    %v126 = vsel %vm125, %v113, %v118
    %vm127 = vcmask 1041408
    %v128 = vsel %vm127, %v126, %v119
    %vm129 = vcmask 1042432
    %v130 = vsel %vm129, %v128, %v124
    %vm131 = vcmask 1043456
    %v132 = vsel %vm131, %v130, %v113
    %vm133 = vcmask 1044480
    %v134 = vsel %vm133, %v132, %v118
    %vm135 = vcmask 1045504
    %v136 = vsel %vm135, %v134, %v119
    %vm137 = vcmask 1046528
    %v138 = vsel %vm137, %v136, %v124
    %139 = vst [vmem:[#allocation8] sm:$0xff] %v138
    // Predicated region
    $region26: #{tpu_custom_call.1} parent=1 // pred_check
      _
    $region27: #{tpu_custom_call.1} parent=1 // pred_check_branch
      %141 = sbr.rel (0) target = $region29
    $region28: #{tpu_custom_call.1} parent=1 // pred_region
      %143 = vsyncadd [#allocation4], 0
      %s145 = sshll.u32 [#allocation8], 4
      %s146 = int_to_ptr.vmem [resolvable:$true] %s145
      %s147 = sshll.u32 %s3, 4
      %s148 = int_to_ptr.hbm [resolvable:$true] %s147
      %150 = dma.vmem_to_hbm [thread:$0]  %s146, 128, %s148, [#allocation4]
    $region29: #{tpu_custom_call.1} parent=1 // pred_fallthru
      _
    // Predicated region
    $region30: #{tpu_custom_call.1} parent=1 // pred_check
      _
    $region31: #{tpu_custom_call.1} parent=1 // pred_check_branch
      %152 = sbr.rel (0) target = $region33
    $region32: #{tpu_custom_call.1} parent=1 // pred_region
      %154 = dma.done [#allocation4], 128
    $region33: #{tpu_custom_call.1} parent=1 // pred_fallthru
      _
    %155 = vsyncpa [#allocation3], 1
    %156 = vsyncpa [#allocation6], 1
    %157 = vsyncpa [#allocation4], 1

</llo_original>
